<compile_context>
chip_gen: v7x
topology: tpu7x:2x2x1
jax: 0.10.0
libtpu: 0.0.40
codegen_flags: <defaults>
</compile_context>

<pallas_src>
import jax
import jax.numpy as jnp
from jax.experimental import pallas as pl
from jax.experimental.pallas import tpu as pltpu


def _attention_kernel(ws_ref, wd_ref, wdec_ref, v_ref, s_ref, d_ref, dec_ref, o_ref):
    # ws_ref/wd_ref/wdec_ref: (H, H)   W split into its static / dynamic / decoder columns
    # v_ref:                  (H, 1)   v as a column
    # s_ref, d_ref:           (Bblk, H, S)
    # dec_ref:                (Bblk, 1, H)
    # o_ref:                  (Bblk, 1, S)
    bblk = s_ref.shape[0]

    # Hoist parameter loads out of the per-batch loop.
    w_s = ws_ref[...]
    w_d = wd_ref[...]
    w_dec = wdec_ref[...]
    v_col = v_ref[...]                                             # (H, 1)

    def body(b, carry):
        # e = W_s @ static_b + W_d @ dynamic_b + (W_dec @ decoder_b)[:, None]
        e = jnp.dot(w_s, s_ref[b], preferred_element_type=jnp.float32)      # (H, S) MXU
        e = e + jnp.dot(w_d, d_ref[b], preferred_element_type=jnp.float32)  # (H, S) MXU
        # Decoder term is rank-1 along S: VPU multiply + lane reduce instead of an
        # N=1 MXU matmul; added BEFORE tanh (matches PyTorch semantics).
        e = e + jnp.sum(w_dec * dec_ref[b], axis=1, keepdims=True)          # (H, 1)
        t = jnp.tanh(e)                                                     # EUP
        # v @ tanh(e): M=1 matmul replaced by VPU multiply + sublane reduce.
        a = jnp.sum(t * v_col, axis=0, keepdims=True)                       # (1, S)
        # Numerically-stable softmax over the sequence (lane) axis.
        a = a - jnp.max(a, axis=-1, keepdims=True)
        ex = jnp.exp(a)
        denom = jnp.sum(ex, axis=-1, keepdims=True)
        r = pl.reciprocal(denom, approx=True)        # EUP fast path
        r = r * (2.0 - denom * r)                    # one Newton step -> ~f32 accuracy
        o_ref[b] = (ex * r).astype(o_ref.dtype)
        return carry

    jax.lax.fori_loop(0, bblk, body, 0, unroll=bblk <= 8)


def _pick_batch_block(B, H, S, itemsize=4, target_bytes=512 * 1024):
    """Pick a batch-block size targeting ~512 KiB of input per grid step.

    512 KiB blocks reach ~85% of HBM roofline and stay well within the scoped VMEM
    budget on all generations (incl. v7x's smaller 64 MiB VMEM) even with
    double-buffering.  When the whole problem fits in one block, we still split into
    two grid steps if each half stays reasonably large, so v7x's two TensorCores both
    get work.
    """
    per_elem = (2 * H * S + H + S) * itemsize
    bblk = int(max(1, min(B, target_bytes // max(per_elem, 1))))
    while B % bblk:
        bblk -= 1
    if bblk == B and B > 1 and (B // 2) * per_elem >= 64 * 1024:
        bblk = B // 2
        while B % bblk:
            bblk -= 1
    return bblk


def attention_forward(W, v, static_hidden, dynamic_hidden, decoder_hidden):
    """W: (1, H, 3H), v: (1, 1, H), static/dynamic: (B, H, S), decoder: (B, H)."""
    B, H, S = static_hidden.shape

    # Tiny parameter-only reshuffling in the wrapper (no big-tensor HBM traffic):
    w2d = W[0]                                   # (H, 3H)
    w_s = w2d[:, :H]                             # (H, H)
    w_d = w2d[:, H:2 * H]                        # (H, H)
    w_dec = w2d[:, 2 * H:]                       # (H, H)
    v_col = v[0].T                               # (H, 1)
    dec3d = decoder_hidden[:, None, :]           # (B, 1, H) -- reshape only

    bblk = _pick_batch_block(B, H, S, itemsize=static_hidden.dtype.itemsize)
    num_blocks = B // bblk

    grid_spec = pltpu.PrefetchScalarGridSpec(
        num_scalar_prefetch=0,
        grid=(num_blocks,),
        in_specs=[
            pl.BlockSpec((H, H), lambda i: (0, 0)),            # W_s   (replicated)
            pl.BlockSpec((H, H), lambda i: (0, 0)),            # W_d   (replicated)
            pl.BlockSpec((H, H), lambda i: (0, 0)),            # W_dec (replicated)
            pl.BlockSpec((H, 1), lambda i: (0, 0)),            # v     (replicated)
            pl.BlockSpec((bblk, H, S), lambda i: (i, 0, 0)),   # static batch block
            pl.BlockSpec((bblk, H, S), lambda i: (i, 0, 0)),   # dynamic batch block
            pl.BlockSpec((bblk, 1, H), lambda i: (i, 0, 0)),   # decoder batch block
        ],
        out_specs=pl.BlockSpec((bblk, 1, S), lambda i: (i, 0, 0)),
    )

    return pl.pallas_call(
        _attention_kernel,
        out_shape=jax.ShapeDtypeStruct((B, 1, S), jnp.float32),
        grid_spec=grid_spec,
        compiler_params=pltpu.CompilerParams(
            dimension_semantics=("parallel",)),
    )(w_s, w_d, w_dec, v_col, static_hidden, dynamic_hidden, dec3d)


def attention_reference(W, v, static_hidden, dynamic_hidden, decoder_hidden):
    """Plain-JAX reference mirroring the PyTorch forward exactly."""
    B, H, S = static_hidden.shape
    dec = jnp.broadcast_to(decoder_hidden[:, :, None], (B, H, S))
    hidden = jnp.concatenate([static_hidden, dynamic_hidden, dec], axis=1)   # (B, 3H, S)
    Wb = jnp.broadcast_to(W, (B, H, 3 * H))
    vb = jnp.broadcast_to(v, (B, 1, H))
    e = jnp.einsum('bhk,bks->bhs', Wb, hidden)
    a = jnp.einsum('boh,bhs->bos', vb, jnp.tanh(e))
    return jax.nn.softmax(a, axis=2)


if __name__ == "__main__":
    B, H, S = 2, 32, 8   # batch, hidden_size, num nodes (sequence)

    key = jax.random.PRNGKey(0)
    k1, k2, k3, k4, k5 = jax.random.split(key, 5)

    # Deterministic synthetic parameters (the module inits them to zeros; small random
    # values exercise a non-trivial softmax).
    W = 0.1 * jax.random.normal(k1, (1, H, 3 * H), dtype=jnp.float32)
    v = 0.1 * jax.random.normal(k2, (1, 1, H), dtype=jnp.float32)

    static_hidden = jax.random.normal(k3, (B, H, S), dtype=jnp.float32)
    dynamic_hidden = jax.random.normal(k4, (B, H, S), dtype=jnp.float32)
    decoder_hidden = jax.random.normal(k5, (B, H), dtype=jnp.float32)

    out = attention_forward(W, v, static_hidden, dynamic_hidden, decoder_hidden)
    out = jax.block_until_ready(out)

    ref = attention_reference(W, v, static_hidden, dynamic_hidden, decoder_hidden)
    assert out.shape == (B, 1, S)
    # Tolerance slightly relaxed vs 1e-5 because the softmax denominator uses the
    # approximate (EUP) reciprocal + one Newton refinement.
    assert jnp.allclose(out, ref, atol=1e-4, rtol=1e-4), "mismatch vs reference"
    assert jnp.allclose(jnp.sum(out, axis=2), 1.0, atol=1e-4), "softmax rows must sum to 1"

    print("KERNEL_OK")
</pallas_src>

<mosaic_0001>
module attributes {stable_mosaic.version = 11 : i64} {
  func.func @_attention_kernel(%arg0: i32, %arg1: memref<32x32xf32, #tpu.memory_space<vmem>>, %arg2: memref<32x32xf32, #tpu.memory_space<vmem>>, %arg3: memref<32x32xf32, #tpu.memory_space<vmem>>, %arg4: memref<32x1xf32, #tpu.memory_space<vmem>>, %arg5: memref<2x32x8xf32, #tpu.memory_space<vmem>>, %arg6: memref<2x32x8xf32, #tpu.memory_space<vmem>>, %arg7: memref<2x1x32xf32, #tpu.memory_space<vmem>>, %arg8: memref<2x1x8xf32, #tpu.memory_space<vmem>>) attributes {dimension_semantics = [#tpu.dimension_semantics<parallel>], iteration_bounds = array<i64: 1>, scalar_prefetch = 0 : i64, scratch_operands = 0 : i64, tpu.core_type = #tpu.core_type<tc>, window_params = [{pipeline_mode = #tpu.pipeline_mode<synchronous>, transform_indices = @transform_0, window_bounds = array<i64: 32, 32>}, {pipeline_mode = #tpu.pipeline_mode<synchronous>, transform_indices = @transform_1, window_bounds = array<i64: 32, 32>}, {pipeline_mode = #tpu.pipeline_mode<synchronous>, transform_indices = @transform_2, window_bounds = array<i64: 32, 32>}, {pipeline_mode = #tpu.pipeline_mode<synchronous>, transform_indices = @transform_3, window_bounds = array<i64: 32, 1>}, {transform_indices = @transform_4, window_bounds = array<i64: 2, 32, 8>}, {transform_indices = @transform_5, window_bounds = array<i64: 2, 32, 8>}, {transform_indices = @transform_6, window_bounds = array<i64: 2, 1, 32>}, {transform_indices = @transform_7, window_bounds = array<i64: 2, 1, 8>}]} {
    %c0 = arith.constant 0 : index
    %c0_0 = arith.constant 0 : index
    %0 = vector.load %arg1[%c0, %c0_0] : memref<32x32xf32, #tpu.memory_space<vmem>>, vector<32x32xf32>
    %c0_1 = arith.constant 0 : index
    %c0_2 = arith.constant 0 : index
    %1 = vector.load %arg2[%c0_1, %c0_2] : memref<32x32xf32, #tpu.memory_space<vmem>>, vector<32x32xf32>
    %c0_3 = arith.constant 0 : index
    %c0_4 = arith.constant 0 : index
    %2 = vector.load %arg3[%c0_3, %c0_4] : memref<32x32xf32, #tpu.memory_space<vmem>>, vector<32x32xf32>
    %c0_5 = arith.constant 0 : index
    %c0_6 = arith.constant 0 : index
    %3 = vector.load %arg4[%c0_5, %c0_6] : memref<32x1xf32, #tpu.memory_space<vmem>>, vector<32x1xf32>
    %c0_i32 = arith.constant 0 : i32
    %4 = arith.index_cast %c0_i32 : i32 to index
    %c0_7 = arith.constant 0 : index
    %c0_8 = arith.constant 0 : index
    %5 = vector.load %arg5[%4, %c0_7, %c0_8] : memref<2x32x8xf32, #tpu.memory_space<vmem>>, vector<1x32x8xf32>
    %6 = vector.shape_cast %5 : vector<1x32x8xf32> to vector<32x8xf32>
    %cst = arith.constant dense<0.000000e+00> : vector<32x8xf32>
    %7 = tpu.matmul %0, %6, %cst {dimension_numbers = #tpu.dot_dimension_numbers<[1], [0], [0], [1], [0, 0, 1, 1], [], []>} : vector<32x32xf32>, vector<32x8xf32>, vector<32x8xf32> -> vector<32x8xf32>
    %8 = arith.index_cast %c0_i32 : i32 to index
    %c0_9 = arith.constant 0 : index
    %c0_10 = arith.constant 0 : index
    %9 = vector.load %arg6[%8, %c0_9, %c0_10] : memref<2x32x8xf32, #tpu.memory_space<vmem>>, vector<1x32x8xf32>
    %10 = vector.shape_cast %9 : vector<1x32x8xf32> to vector<32x8xf32>
    %cst_11 = arith.constant dense<0.000000e+00> : vector<32x8xf32>
    %11 = tpu.matmul %1, %10, %cst_11 {dimension_numbers = #tpu.dot_dimension_numbers<[1], [0], [0], [1], [0, 0, 1, 1], [], []>} : vector<32x32xf32>, vector<32x8xf32>, vector<32x8xf32> -> vector<32x8xf32>
    %12 = arith.addf %7, %11 : vector<32x8xf32>
    %13 = arith.index_cast %c0_i32 : i32 to index
    %c0_12 = arith.constant 0 : index
    %c0_13 = arith.constant 0 : index
    %14 = vector.load %arg7[%13, %c0_12, %c0_13] : memref<2x1x32xf32, #tpu.memory_space<vmem>>, vector<1x1x32xf32>
    %15 = vector.shape_cast %14 : vector<1x1x32xf32> to vector<1x32xf32>
    %16 = vector.broadcast %15 : vector<1x32xf32> to vector<32x32xf32>
    %17 = arith.mulf %2, %16 : vector<32x32xf32>
    %cst_14 = arith.constant dense<0.000000e+00> : vector<32xf32>
    %18 = vector.multi_reduction <add>, %17, %cst_14 [1] : vector<32x32xf32> to vector<32xf32>
    %19 = vector.shape_cast %18 : vector<32xf32> to vector<32x1xf32>
    %20 = vector.broadcast %19 : vector<32x1xf32> to vector<32x8xf32>
    %21 = arith.addf %12, %20 : vector<32x8xf32>
    %22 = math.tanh %21 : vector<32x8xf32>
    %23 = vector.broadcast %3 : vector<32x1xf32> to vector<32x8xf32>
    %24 = arith.mulf %22, %23 : vector<32x8xf32>
    %cst_15 = arith.constant dense<0.000000e+00> : vector<8xf32>
    %25 = vector.multi_reduction <add>, %24, %cst_15 [0] : vector<32x8xf32> to vector<8xf32>
    %26 = vector.shape_cast %25 : vector<8xf32> to vector<1x8xf32>
    %cst_16 = arith.constant dense<0xFF800000> : vector<1xf32>
    %27 = vector.multi_reduction <maximumf>, %26, %cst_16 [1] : vector<1x8xf32> to vector<1xf32>
    %28 = vector.shape_cast %27 : vector<1xf32> to vector<1x1xf32>
    %29 = vector.broadcast %28 : vector<1x1xf32> to vector<1x8xf32>
    %30 = arith.subf %26, %29 : vector<1x8xf32>
    %31 = math.exp %30 : vector<1x8xf32>
    %cst_17 = arith.constant dense<0.000000e+00> : vector<1xf32>
    %32 = vector.multi_reduction <add>, %31, %cst_17 [1] : vector<1x8xf32> to vector<1xf32>
    %33 = vector.shape_cast %32 : vector<1xf32> to vector<1x1xf32>
    %34 = tpu.reciprocal %33 {approx = true} : vector<1x1xf32> -> vector<1x1xf32>
    %35 = arith.mulf %33, %34 : vector<1x1xf32>
    %cst_18 = arith.constant 2.000000e+00 : f32
    %36 = vector.broadcast %cst_18 : f32 to vector<1x1xf32>
    %37 = arith.subf %36, %35 : vector<1x1xf32>
    %38 = arith.mulf %34, %37 : vector<1x1xf32>
    %39 = vector.broadcast %38 : vector<1x1xf32> to vector<1x8xf32>
    %40 = arith.mulf %31, %39 : vector<1x8xf32>
    %41 = arith.index_cast %c0_i32 : i32 to index
    %c0_19 = arith.constant 0 : index
    %c0_20 = arith.constant 0 : index
    %42 = vector.load %arg8[%41, %c0_19, %c0_20] : memref<2x1x8xf32, #tpu.memory_space<vmem>>, vector<1x1x8xf32>
    %43 = vector.shape_cast %42 : vector<1x1x8xf32> to vector<1x8xf32>
    %44 = vector.shape_cast %40 : vector<1x8xf32> to vector<1x1x8xf32>
    tpu.vector_store %arg8[%41, %c0_19, %c0_20], %44 {strides = array<i32>} : memref<2x1x8xf32, #tpu.memory_space<vmem>>, vector<1x1x8xf32>,
    %c1_i32 = arith.constant 1 : i32
    %45 = arith.index_cast %c1_i32 : i32 to index
    %c0_21 = arith.constant 0 : index
    %c0_22 = arith.constant 0 : index
    %46 = vector.load %arg5[%45, %c0_21, %c0_22] : memref<2x32x8xf32, #tpu.memory_space<vmem>>, vector<1x32x8xf32>
    %47 = vector.shape_cast %46 : vector<1x32x8xf32> to vector<32x8xf32>
    %cst_23 = arith.constant dense<0.000000e+00> : vector<32x8xf32>
    %48 = tpu.matmul %0, %47, %cst_23 {dimension_numbers = #tpu.dot_dimension_numbers<[1], [0], [0], [1], [0, 0, 1, 1], [], []>} : vector<32x32xf32>, vector<32x8xf32>, vector<32x8xf32> -> vector<32x8xf32>
    %49 = arith.index_cast %c1_i32 : i32 to index
    %c0_24 = arith.constant 0 : index
    %c0_25 = arith.constant 0 : index
    %50 = vector.load %arg6[%49, %c0_24, %c0_25] : memref<2x32x8xf32, #tpu.memory_space<vmem>>, vector<1x32x8xf32>
    %51 = vector.shape_cast %50 : vector<1x32x8xf32> to vector<32x8xf32>
    %cst_26 = arith.constant dense<0.000000e+00> : vector<32x8xf32>
    %52 = tpu.matmul %1, %51, %cst_26 {dimension_numbers = #tpu.dot_dimension_numbers<[1], [0], [0], [1], [0, 0, 1, 1], [], []>} : vector<32x32xf32>, vector<32x8xf32>, vector<32x8xf32> -> vector<32x8xf32>
    %53 = arith.addf %48, %52 : vector<32x8xf32>
    %54 = arith.index_cast %c1_i32 : i32 to index
    %c0_27 = arith.constant 0 : index
    %c0_28 = arith.constant 0 : index
    %55 = vector.load %arg7[%54, %c0_27, %c0_28] : memref<2x1x32xf32, #tpu.memory_space<vmem>>, vector<1x1x32xf32>
    %56 = vector.shape_cast %55 : vector<1x1x32xf32> to vector<1x32xf32>
    %57 = vector.broadcast %56 : vector<1x32xf32> to vector<32x32xf32>
    %58 = arith.mulf %2, %57 : vector<32x32xf32>
    %cst_29 = arith.constant dense<0.000000e+00> : vector<32xf32>
    %59 = vector.multi_reduction <add>, %58, %cst_29 [1] : vector<32x32xf32> to vector<32xf32>
    %60 = vector.shape_cast %59 : vector<32xf32> to vector<32x1xf32>
    %61 = vector.broadcast %60 : vector<32x1xf32> to vector<32x8xf32>
    %62 = arith.addf %53, %61 : vector<32x8xf32>
    %63 = math.tanh %62 : vector<32x8xf32>
    %64 = vector.broadcast %3 : vector<32x1xf32> to vector<32x8xf32>
    %65 = arith.mulf %63, %64 : vector<32x8xf32>
    %cst_30 = arith.constant dense<0.000000e+00> : vector<8xf32>
    %66 = vector.multi_reduction <add>, %65, %cst_30 [0] : vector<32x8xf32> to vector<8xf32>
    %67 = vector.shape_cast %66 : vector<8xf32> to vector<1x8xf32>
    %cst_31 = arith.constant dense<0xFF800000> : vector<1xf32>
    %68 = vector.multi_reduction <maximumf>, %67, %cst_31 [1] : vector<1x8xf32> to vector<1xf32>
    %69 = vector.shape_cast %68 : vector<1xf32> to vector<1x1xf32>
    %70 = vector.broadcast %69 : vector<1x1xf32> to vector<1x8xf32>
    %71 = arith.subf %67, %70 : vector<1x8xf32>
    %72 = math.exp %71 : vector<1x8xf32>
    %cst_32 = arith.constant dense<0.000000e+00> : vector<1xf32>
    %73 = vector.multi_reduction <add>, %72, %cst_32 [1] : vector<1x8xf32> to vector<1xf32>
    %74 = vector.shape_cast %73 : vector<1xf32> to vector<1x1xf32>
    %75 = tpu.reciprocal %74 {approx = true} : vector<1x1xf32> -> vector<1x1xf32>
    %76 = arith.mulf %74, %75 : vector<1x1xf32>
    %cst_33 = arith.constant 2.000000e+00 : f32
    %77 = vector.broadcast %cst_33 : f32 to vector<1x1xf32>
    %78 = arith.subf %77, %76 : vector<1x1xf32>
    %79 = arith.mulf %75, %78 : vector<1x1xf32>
    %80 = vector.broadcast %79 : vector<1x1xf32> to vector<1x8xf32>
    %81 = arith.mulf %72, %80 : vector<1x8xf32>
    %82 = arith.index_cast %c1_i32 : i32 to index
    %c0_34 = arith.constant 0 : index
    %c0_35 = arith.constant 0 : index
    %83 = vector.load %arg8[%82, %c0_34, %c0_35] : memref<2x1x8xf32, #tpu.memory_space<vmem>>, vector<1x1x8xf32>
    %84 = vector.shape_cast %83 : vector<1x1x8xf32> to vector<1x8xf32>
    %85 = vector.shape_cast %81 : vector<1x8xf32> to vector<1x1x8xf32>
    tpu.vector_store %arg8[%82, %c0_34, %c0_35], %85 {strides = array<i32>} : memref<2x1x8xf32, #tpu.memory_space<vmem>>, vector<1x1x8xf32>,
    %c2_i32 = arith.constant 2 : i32
    return
  }
  func.func @transform_0(%arg0: i32) -> (i32, i32) {
    %c0_i32 = arith.constant 0 : i32
    %c0_i32_0 = arith.constant 0 : i32
    %c0_i32_1 = arith.constant 0 : i32
    return %c0_i32, %c0_i32_0 : i32, i32
  }
  func.func @transform_1(%arg0: i32) -> (i32, i32) {
    %c0_i32 = arith.constant 0 : i32
    %c0_i32_0 = arith.constant 0 : i32
    %c0_i32_1 = arith.constant 0 : i32
    return %c0_i32, %c0_i32_0 : i32, i32
  }
  func.func @transform_2(%arg0: i32) -> (i32, i32) {
    %c0_i32 = arith.constant 0 : i32
    %c0_i32_0 = arith.constant 0 : i32
    %c0_i32_1 = arith.constant 0 : i32
    return %c0_i32, %c0_i32_0 : i32, i32
  }
  func.func @transform_3(%arg0: i32) -> (i32, i32) {
    %c0_i32 = arith.constant 0 : i32
    %c0_i32_0 = arith.constant 0 : i32
    %c0_i32_1 = arith.constant 0 : i32
    return %c0_i32, %c0_i32_0 : i32, i32
  }
  func.func @transform_4(%arg0: i32) -> (i32, i32, i32) {
    %c0_i32 = arith.constant 0 : i32
    %c0_i32_0 = arith.constant 0 : i32
    %c0_i32_1 = arith.constant 0 : i32
    return %arg0, %c0_i32, %c0_i32_0 : i32, i32, i32
  }
  func.func @transform_5(%arg0: i32) -> (i32, i32, i32) {
    %c0_i32 = arith.constant 0 : i32
    %c0_i32_0 = arith.constant 0 : i32
    %c0_i32_1 = arith.constant 0 : i32
    return %arg0, %c0_i32, %c0_i32_0 : i32, i32, i32
  }
  func.func @transform_6(%arg0: i32) -> (i32, i32, i32) {
    %c0_i32 = arith.constant 0 : i32
    %c0_i32_0 = arith.constant 0 : i32
    %c0_i32_1 = arith.constant 0 : i32
    return %arg0, %c0_i32, %c0_i32_0 : i32, i32, i32
  }
  func.func @transform_7(%arg0: i32) -> (i32, i32, i32) {
    %c0_i32 = arith.constant 0 : i32
    %c0_i32_0 = arith.constant 0 : i32
    %c0_i32_1 = arith.constant 0 : i32
    return %arg0, %c0_i32, %c0_i32_0 : i32, i32, i32
  }
}

</mosaic_0001>

<llo_original>
// kernel: tpu_custom_call.1
$region0: #{tpu_custom_call.1}
  #allocation0 [shape = 'u32[]', space=smem, size = 0x4, offset = 0x4, fixed_abs, tag = 'smem constant byte address 0x4 - core index']
  #allocation1 [shape = 'u32[144,128]{1,0:T(1,128)}', space=vmem, size = 0x12000, scoped, tag = 'internal scratch']
  %s0 = inlined_call_operand.vmem [shape: f32[32,32], index: 0, kind: input, shape index: {}]
  %s1 = inlined_call_operand.vmem [shape: f32[32,32], index: 1, kind: input, shape index: {}]
  %s2 = inlined_call_operand.vmem [shape: f32[32,32], index: 2, kind: input, shape index: {}]
  %s3 = inlined_call_operand.vmem [shape: f32[32,1], index: 3, kind: input, shape index: {}]
  %s4 = inlined_call_operand.vmem [shape: f32[2,32,8], index: 4, kind: input, shape index: {}]
  %s5 = inlined_call_operand.vmem [shape: f32[2,32,8], index: 5, kind: input, shape index: {}]
  %s6 = inlined_call_operand.vmem [shape: f32[2,1,32], index: 6, kind: input, shape index: {}]
  %s7 = inlined_call_operand.hbm [shape: f32[2,1,8], index: 7, kind: output, shape index: {}]
  %s8 = sld [smem:[#allocation0]]
  $region38: #{tpu_custom_call.1} parent=0
    _
  %s10 = ssub.s32 1, %s8
  %s11 = scalar_select 0, %s10, %s8
  $region1: #{tpu_custom_call.1} parent=0
    #allocation2 [shape = 'u8[1024]{0}', space=vmem, size = 0x400, scoped, tag = 'output window, operand 0, single buffered']
    #allocation3 [shape = 's32[1]{0}', space=sflag, size = 0x4, scoped, tag = 'scoped memory for tpu_custom_call.1']
    %12 = vsyncpa [#allocation3], 0
    // Predicated region
    $region2: #{tpu_custom_call.1} parent=1 // pred_check
      _
    $region3: #{tpu_custom_call.1} parent=1 // pred_check_branch
      %14 = sbr.rel (0) target = $region5
    $region4: #{tpu_custom_call.1} parent=1 // pred_region
      _
    $region5: #{tpu_custom_call.1} parent=1 // pred_fallthru
      _
    // Predicated region
    $region6: #{tpu_custom_call.1} parent=1 // pred_check
      _
    $region7: #{tpu_custom_call.1} parent=1 // pred_check_branch
      %16 = sbr.rel (0) target = $region9
    $region8: #{tpu_custom_call.1} parent=1 // pred_region
      _
    $region9: #{tpu_custom_call.1} parent=1 // pred_fallthru
      _
    // Predicated region
    $region10: #{tpu_custom_call.1} parent=1 // pred_check
      _
    $region11: #{tpu_custom_call.1} parent=1 // pred_check_branch
      %18 = sbr.rel (0) target = $region13
    $region12: #{tpu_custom_call.1} parent=1 // pred_region
      _
    $region13: #{tpu_custom_call.1} parent=1 // pred_fallthru
      _
    // Predicated region
    $region14: #{tpu_custom_call.1} parent=1 // pred_check
      _
    $region15: #{tpu_custom_call.1} parent=1 // pred_check_branch
      %20 = sbr.rel (0) target = $region17
    $region16: #{tpu_custom_call.1} parent=1 // pred_region
      _
    $region17: #{tpu_custom_call.1} parent=1 // pred_fallthru
      _
    // Predicated region
    $region18: #{tpu_custom_call.1} parent=1 // pred_check
      _
    $region19: #{tpu_custom_call.1} parent=1 // pred_check_branch
      %22 = sbr.rel (0) target = $region21
    $region20: #{tpu_custom_call.1} parent=1 // pred_region
      _
    $region21: #{tpu_custom_call.1} parent=1 // pred_fallthru
      _
    // Predicated region
    $region22: #{tpu_custom_call.1} parent=1 // pred_check
      _
    $region23: #{tpu_custom_call.1} parent=1 // pred_check_branch
      %24 = sbr.rel (0) target = $region25
    $region24: #{tpu_custom_call.1} parent=1 // pred_region
      _
    $region25: #{tpu_custom_call.1} parent=1 // pred_fallthru
      _
    // Predicated region
    $region26: #{tpu_custom_call.1} parent=1 // pred_check
      _
    $region27: #{tpu_custom_call.1} parent=1 // pred_check_branch
      %26 = sbr.rel (0) target = $region29
    $region28: #{tpu_custom_call.1} parent=1 // pred_region
      _
    $region29: #{tpu_custom_call.1} parent=1 // pred_fallthru
      _
    %v27 = vld [vmem:[%s0] sm:$0xff]
    %v28 = vld [vmem:[%s0 + $0x8] sm:$0xff]
    %v29 = vld [vmem:[%s0 + $0x10] sm:$0xff]
    %v30 = vld [vmem:[%s0 + $0x18] sm:$0xff]
    %v31 = vld [vmem:[%s1] sm:$0xff]
    %v32 = vld [vmem:[%s1 + $0x8] sm:$0xff]
    %v33 = vld [vmem:[%s1 + $0x10] sm:$0xff]
    %v34 = vld [vmem:[%s1 + $0x18] sm:$0xff]
    %v35 = vld [vmem:[%s2] sm:$0xff]
    %v36 = vld [vmem:[%s2 + $0x8] sm:$0xff]
    %v37 = vld [vmem:[%s2 + $0x10] sm:$0xff]
    %v38 = vld [vmem:[%s2 + $0x18] sm:$0xff]
    %v39 = vld [vmem:[%s3] sm:$0xff]
    %v40 = vld [vmem:[%s3 + $0x8] sm:$0xff]
    %v41 = vld [vmem:[%s3 + $0x10] sm:$0xff]
    %v42 = vld [vmem:[%s3 + $0x18] sm:$0xff]
    %v43 = vld [vmem:[%s4] sm:$0xff]
    %v44 = vld [vmem:[%s4 + $0x8] sm:$0xff]
    %v45 = vld [vmem:[%s4 + $0x10] sm:$0xff]
    %v46 = vld [vmem:[%s4 + $0x18] sm:$0xff]
    %v47 = vld [vmem:[%s5] sm:$0xff]
    %v48 = vld [vmem:[%s5 + $0x8] sm:$0xff]
    %v49 = vld [vmem:[%s5 + $0x10] sm:$0xff]
    %v50 = vld [vmem:[%s5 + $0x18] sm:$0xff]
    %vm51 = vcmask 261120
    %v53 = vsel %vm51, %v31, 0
    %v56 = vsel %vm51, %v32, 0
    %v59 = vsel %vm51, %v33, 0
    %v62 = vsel %vm51, %v34, 0
    %64 = vmatprep.subr.mxu0 0.0
    %65 = vmatpush1.msra.mxu0 %v47
    %66 = vmatprep.subr.mxu0 0.0
    %67 = vmatpush1.msra.mxu0 %v48
    %68 = vmatprep.subr.mxu0 0.0
    %69 = vmatpush1.msra.mxu0 %v49
    %70 = vmatprep.subr.mxu0 0.0
    %71 = vmatpush1.msra.mxu0 %v50
    %72 = vmatprep.subr.mxu0 0.0
    %73 = vmatpush1.msra.mxu0 0.0
    %74 = vmatprep.subr.mxu0 0.0
    %75 = vmatpush1.msra.mxu0 0.0
    %76 = vmatprep.subr.mxu0 0.0
    %77 = vmatpush1.msra.mxu0 0.0
    %78 = vmatprep.subr.mxu0 0.0
    %79 = vmatpush1.msra.mxu0 0.0
    %80 = vmatprep.subr.mxu0 0.0
    %81 = vmatpush1.msra.mxu0 0.0
    %82 = vmatprep.subr.mxu0 0.0
    %83 = vmatpush1.msra.mxu0 0.0
    %84 = vmatprep.subr.mxu0 0.0
    %85 = vmatpush1.msra.mxu0 0.0
    %86 = vmatprep.subr.mxu0 0.0
    %87 = vmatpush1.msra.mxu0 0.0
    %88 = vmatprep.subr.mxu0 0.0
    %89 = vmatpush1.msra.mxu0 0.0
    %90 = vmatprep.subr.mxu0 0.0
    %91 = vmatpush1.msra.mxu0 0.0
    %92 = vmatprep.subr.mxu0 0.0
    %93 = vmatpush1.msra.mxu0 0.0
    %94 = vmatprep.subr.mxu0 0.0
    %95 = vmatpush1.msra.mxu0 0.0
    %96 = vmatprep.subr.mxu0 0.0
    %97 = vmatpush1.msra.mxu0 0.0
    %98 = vmatprep.subr.mxu0 0.0
    %99 = vmatpush1.msra.mxu0 0.0
    %100 = vmatprep.subr.mxu0 0.0
    %101 = vmatpush1.msra.mxu0 0.0
    %102 = vmatprep.subr.mxu0 0.0
    %103 = vmatpush1.msra.mxu0 0.0
    %104 = vmatprep.subr.mxu0 0.0
    %105 = vmatpush1.msra.mxu0 0.0
    %106 = vmatprep.subr.mxu0 0.0
    %107 = vmatpush1.msra.mxu0 0.0
    %108 = vmatprep.subr.mxu0 0.0
    %109 = vmatpush1.msra.mxu0 0.0
    %110 = vmatprep.subr.mxu0 0.0
    %111 = vmatpush1.msra.mxu0 0.0
    %112 = vmatprep.subr.mxu0 0.0
    %113 = vmatpush1.msra.mxu0 0.0
    %114 = vmatprep.subr.mxu0 0.0
    %115 = vmatpush1.msra.mxu0 0.0
    %116 = vmatprep.subr.mxu0 0.0
    %117 = vmatpush1.msra.mxu0 0.0
    %118 = vmatprep.subr.mxu0 0.0
    %119 = vmatpush1.msra.mxu0 0.0
    %120 = vmatprep.subr.mxu0 0.0
    %121 = vmatpush1.msra.mxu0 0.0
    %122 = vmatprep.subr.mxu0 0.0
    %123 = vmatpush1.msra.mxu0 0.0
    %124 = vmatprep.subr.mxu0 0.0
    %125 = vmatpush1.msra.mxu0 0.0
    %126 = vmatprep.subr.mxu0 0.0
    %127 = vmatpush1.msra.mxu0 0.0
    %128 = vmatprep.mubr.f32.mxu0 0.0
    %129 = vmatmul.mubr.f32.gmra.mrb[0].mxu0 %v53
    %v130 = vpop.f32.mrb[0].mxu0
    %v131 = vadd.f32 0.0, %v130
    %v132 = vpop.f32.mrb[0].mxu0
    %133 = vmatprep.mubr.f32.mxu0 0.0
    %134 = vmatmul.mubr.f32.gmra.mrb[0].mxu0 %v56
    %v135 = vpop.f32.mrb[0].mxu0
    %v136 = vadd.f32 0.0, %v135
    %v137 = vpop.f32.mrb[0].mxu0
    %138 = vmatprep.mubr.f32.mxu0 0.0
    %139 = vmatmul.mubr.f32.gmra.mrb[0].mxu0 %v59
    %v140 = vpop.f32.mrb[0].mxu0
    %v141 = vadd.f32 0.0, %v140
    %v142 = vpop.f32.mrb[0].mxu0
    %143 = vmatprep.mubr.f32.mxu0 0.0
    %144 = vmatmul.mubr.f32.gmra.mrb[0].mxu0 %v62
    %v145 = vpop.f32.mrb[0].mxu0
    %v146 = vadd.f32 0.0, %v145
    %v147 = vpop.f32.mrb[0].mxu0
    %148 = vdwg.mxu0
    %v150 = vsel %vm51, %v27, 0
    %v153 = vsel %vm51, %v28, 0
    %v156 = vsel %vm51, %v29, 0
    %v159 = vsel %vm51, %v30, 0
    %161 = vmatprep.subr.mxu0 0.0
    %162 = vmatpush1.msra.mxu0 %v43
    %163 = vmatprep.subr.mxu0 0.0
    %164 = vmatpush1.msra.mxu0 %v44
    %165 = vmatprep.subr.mxu0 0.0
    %166 = vmatpush1.msra.mxu0 %v45
    %167 = vmatprep.subr.mxu0 0.0
    %168 = vmatpush1.msra.mxu0 %v46
    %169 = vmatprep.subr.mxu0 0.0
    %170 = vmatpush1.msra.mxu0 0.0
    %171 = vmatprep.subr.mxu0 0.0
    %172 = vmatpush1.msra.mxu0 0.0
    %173 = vmatprep.subr.mxu0 0.0
    %174 = vmatpush1.msra.mxu0 0.0
    %175 = vmatprep.subr.mxu0 0.0
    %176 = vmatpush1.msra.mxu0 0.0
    %177 = vmatprep.subr.mxu0 0.0
    %178 = vmatpush1.msra.mxu0 0.0
    %179 = vmatprep.subr.mxu0 0.0
    %180 = vmatpush1.msra.mxu0 0.0
    %181 = vmatprep.subr.mxu0 0.0
    %182 = vmatpush1.msra.mxu0 0.0
    %183 = vmatprep.subr.mxu0 0.0
    %184 = vmatpush1.msra.mxu0 0.0
    %185 = vmatprep.subr.mxu0 0.0
    %186 = vmatpush1.msra.mxu0 0.0
    %187 = vmatprep.subr.mxu0 0.0
    %188 = vmatpush1.msra.mxu0 0.0
    %189 = vmatprep.subr.mxu0 0.0
    %190 = vmatpush1.msra.mxu0 0.0
    %191 = vmatprep.subr.mxu0 0.0
    %192 = vmatpush1.msra.mxu0 0.0
    %193 = vmatprep.subr.mxu0 0.0
    %194 = vmatpush1.msra.mxu0 0.0
    %195 = vmatprep.subr.mxu0 0.0
    %196 = vmatpush1.msra.mxu0 0.0
    %197 = vmatprep.subr.mxu0 0.0
    %198 = vmatpush1.msra.mxu0 0.0
    %199 = vmatprep.subr.mxu0 0.0
    %200 = vmatpush1.msra.mxu0 0.0
    %201 = vmatprep.subr.mxu0 0.0
    %202 = vmatpush1.msra.mxu0 0.0
    %203 = vmatprep.subr.mxu0 0.0
    %204 = vmatpush1.msra.mxu0 0.0
    %205 = vmatprep.subr.mxu0 0.0
    %206 = vmatpush1.msra.mxu0 0.0
    %207 = vmatprep.subr.mxu0 0.0
    %208 = vmatpush1.msra.mxu0 0.0
    %209 = vmatprep.subr.mxu0 0.0
    %210 = vmatpush1.msra.mxu0 0.0
    %211 = vmatprep.subr.mxu0 0.0
    %212 = vmatpush1.msra.mxu0 0.0
    %213 = vmatprep.subr.mxu0 0.0
    %214 = vmatpush1.msra.mxu0 0.0
    %215 = vmatprep.subr.mxu0 0.0
    %216 = vmatpush1.msra.mxu0 0.0
    %217 = vmatprep.subr.mxu0 0.0
    %218 = vmatpush1.msra.mxu0 0.0
    %219 = vmatprep.subr.mxu0 0.0
    %220 = vmatpush1.msra.mxu0 0.0
    %221 = vmatprep.subr.mxu0 0.0
    %222 = vmatpush1.msra.mxu0 0.0
    %223 = vmatprep.subr.mxu0 0.0
    %224 = vmatpush1.msra.mxu0 0.0
    %225 = vmatprep.mubr.f32.mxu0 0.0
    %226 = vmatmul.mubr.f32.gmra.mrb[0].mxu0 %v150
    %v227 = vpop.f32.mrb[0].mxu0
    %v228 = vadd.f32 %v131, %v227
    %v229 = vpop.f32.mrb[0].mxu0
    %230 = vmatprep.mubr.f32.mxu0 0.0
    %231 = vmatmul.mubr.f32.gmra.mrb[0].mxu0 %v153
    %v232 = vpop.f32.mrb[0].mxu0
    %v233 = vadd.f32 %v136, %v232
    %v234 = vpop.f32.mrb[0].mxu0
    %235 = vmatprep.mubr.f32.mxu0 0.0
    %236 = vmatmul.mubr.f32.gmra.mrb[0].mxu0 %v156
    %v237 = vpop.f32.mrb[0].mxu0
    %v238 = vadd.f32 %v141, %v237
    %v239 = vpop.f32.mrb[0].mxu0
    %240 = vmatprep.mubr.f32.mxu0 0.0
    %241 = vmatmul.mubr.f32.gmra.mrb[0].mxu0 %v159
    %v242 = vpop.f32.mrb[0].mxu0
    %v243 = vadd.f32 %v146, %v242
    %v244 = vpop.f32.mrb[0].mxu0
    %245 = vdwg.mxu0
    %v246 = vld [vmem:[%s6] sm:$0x1]
    %v248 = vlaneseq
    %v249 = vshrl.u32 %v248, 7
    %v250 = vsub.s32 0, %v249
    %v251 = vrot.slane %v246, %v250
    %v253 = vmul.f32 %v35, %v251
    %v254 = vmul.f32 %v36, %v251
    %v255 = vmul.f32 %v37, %v251
    %v256 = vmul.f32 %v38, %v251
    %v257 = vsel %vm51, %v253, 0.0
    %258 = vadd.xlane.f32.xlu0 %v257
    %v259 = vpop.xlane.xlu0 %258
    %v260 = vsel %vm51, %v254, 0.0
    %261 = vadd.xlane.f32.xlu0 %v260
    %v262 = vpop.xlane.xlu0 %261
    %v263 = vsel %vm51, %v255, 0.0
    %264 = vadd.xlane.f32.xlu0 %v263
    %v265 = vpop.xlane.xlu0 %264
    %v266 = vsel %vm51, %v256, 0.0
    %267 = vadd.xlane.f32.xlu0 %v266
    %v268 = vpop.xlane.xlu0 %267
    %v269 = vadd.f32 %v228, %v259
    %v270 = vadd.f32 %v233, %v262
    %v271 = vadd.f32 %v238, %v265
    %v272 = vadd.f32 %v243, %v268
    %v273 = vtanh.pop %v269
    %v274 = vtanh.pop %v270
    %v275 = vtanh.pop %v271
    %v276 = vtanh.pop %v272
    %278 = vset.pattern.permute.xlu0 0
    %279 = vperm.xlu0 %278, %v39
    %v280 = vpop.permute.xlu0 %279
    %283 = vset.pattern.permute.xlu0 0
    %284 = vperm.xlu0 %283, %v40
    %v285 = vpop.permute.xlu0 %284
    %288 = vset.pattern.permute.xlu0 0
    %289 = vperm.xlu0 %288, %v41
    %v290 = vpop.permute.xlu0 %289
    %293 = vset.pattern.permute.xlu0 0
    %294 = vperm.xlu0 %293, %v42
    %v295 = vpop.permute.xlu0 %294
    %v297 = vmul.f32 %v273, %v280
    %v298 = vmul.f32 %v274, %v285
    %v299 = vmul.f32 %v275, %v290
    %v300 = vmul.f32 %v276, %v295
    %vm301 = vcmask 64512
    %v302 = vsel %vm301, %v297, 0.0
    %v303 = vsel %vm301, %v298, 0.0
    %v304 = vadd.f32 %v302, %v303
    %v305 = vsel %vm301, %v299, 0.0
    %v306 = vadd.f32 %v304, %v305
    %v307 = vsel %vm301, %v300, 0.0
    %v308 = vadd.f32 %v306, %v307
    %v309 = vrot.slane %v308, 4
    %v310 = vadd.f32 %v308, %v309
    %v311 = vrot.slane %v310, 2
    %v312 = vadd.f32 %v310, %v311
    %v313 = vrot.slane %v312, 1
    %v314 = vadd.f32 %v312, %v313
    %v315 = vsel %vm301, %v314, -inf
    %316 = vmax.xlane.f32.xlu0 %v315
    %v317 = vpop.xlane.xlu0 %316
    %v318 = vsub.f32 %v314, %v317
    %v319 = vmul.f32 %v318, 1.442695
    %v320 = vpow.pop %v319
    %v321 = vsel %vm301, %v320, 0.0
    %322 = vadd.xlane.f32.xlu0 %v321
    %v323 = vpop.xlane.xlu0 %322
    %v324 = vrcp.pop %v323
    %v325 = vmul.f32 %v323, %v324
    %v326 = vsub.f32 2.0, %v325
    %v327 = vmul.f32 %v324, %v326
    %v328 = vmul.f32 %v320, %v327
    %vm329 = vcmask 57344
    %330 = vst.msk [vmem:[#allocation2] sm:$0x1] %vm329, %v328
    %s331 = scalar_lea.vmem %s4, 32
    %v332 = vld [vmem:[%s331] sm:$0xff]
    %v333 = vld [vmem:[%s331 + $0x8] sm:$0xff]
    %v334 = vld [vmem:[%s331 + $0x10] sm:$0xff]
    %v335 = vld [vmem:[%s331 + $0x18] sm:$0xff]
    %s336 = scalar_lea.vmem %s5, 32
    %v337 = vld [vmem:[%s336] sm:$0xff]
    %v338 = vld [vmem:[%s336 + $0x8] sm:$0xff]
    %v339 = vld [vmem:[%s336 + $0x10] sm:$0xff]
    %v340 = vld [vmem:[%s336 + $0x18] sm:$0xff]
    %341 = vmatprep.subr.mxu0 0.0
    %342 = vmatpush1.msra.mxu0 %v337
    %343 = vmatprep.subr.mxu0 0.0
    %344 = vmatpush1.msra.mxu0 %v338
    %345 = vmatprep.subr.mxu0 0.0
    %346 = vmatpush1.msra.mxu0 %v339
    %347 = vmatprep.subr.mxu0 0.0
    %348 = vmatpush1.msra.mxu0 %v340
    %349 = vmatprep.subr.mxu0 0.0
    %350 = vmatpush1.msra.mxu0 0.0
    %351 = vmatprep.subr.mxu0 0.0
    %352 = vmatpush1.msra.mxu0 0.0
    %353 = vmatprep.subr.mxu0 0.0
    %354 = vmatpush1.msra.mxu0 0.0
    %355 = vmatprep.subr.mxu0 0.0
    %356 = vmatpush1.msra.mxu0 0.0
    %357 = vmatprep.subr.mxu0 0.0
    %358 = vmatpush1.msra.mxu0 0.0
    %359 = vmatprep.subr.mxu0 0.0
    %360 = vmatpush1.msra.mxu0 0.0
    %361 = vmatprep.subr.mxu0 0.0
    %362 = vmatpush1.msra.mxu0 0.0
    %363 = vmatprep.subr.mxu0 0.0
    %364 = vmatpush1.msra.mxu0 0.0
    %365 = vmatprep.subr.mxu0 0.0
    %366 = vmatpush1.msra.mxu0 0.0
    %367 = vmatprep.subr.mxu0 0.0
    %368 = vmatpush1.msra.mxu0 0.0
    %369 = vmatprep.subr.mxu0 0.0
    %370 = vmatpush1.msra.mxu0 0.0
    %371 = vmatprep.subr.mxu0 0.0
    %372 = vmatpush1.msra.mxu0 0.0
    %373 = vmatprep.subr.mxu0 0.0
    %374 = vmatpush1.msra.mxu0 0.0
    %375 = vmatprep.subr.mxu0 0.0
    %376 = vmatpush1.msra.mxu0 0.0
    %377 = vmatprep.subr.mxu0 0.0
    %378 = vmatpush1.msra.mxu0 0.0
    %379 = vmatprep.subr.mxu0 0.0
    %380 = vmatpush1.msra.mxu0 0.0
    %381 = vmatprep.subr.mxu0 0.0
    %382 = vmatpush1.msra.mxu0 0.0
    %383 = vmatprep.subr.mxu0 0.0
    %384 = vmatpush1.msra.mxu0 0.0
    %385 = vmatprep.subr.mxu0 0.0
    %386 = vmatpush1.msra.mxu0 0.0
    %387 = vmatprep.subr.mxu0 0.0
    %388 = vmatpush1.msra.mxu0 0.0
    %389 = vmatprep.subr.mxu0 0.0
    %390 = vmatpush1.msra.mxu0 0.0
    %391 = vmatprep.subr.mxu0 0.0
    %392 = vmatpush1.msra.mxu0 0.0
    %393 = vmatprep.subr.mxu0 0.0
    %394 = vmatpush1.msra.mxu0 0.0
    %395 = vmatprep.subr.mxu0 0.0
    %396 = vmatpush1.msra.mxu0 0.0
    %397 = vmatprep.subr.mxu0 0.0
    %398 = vmatpush1.msra.mxu0 0.0
    %399 = vmatprep.subr.mxu0 0.0
    %400 = vmatpush1.msra.mxu0 0.0
    %401 = vmatprep.subr.mxu0 0.0
    %402 = vmatpush1.msra.mxu0 0.0
    %403 = vmatprep.subr.mxu0 0.0
    %404 = vmatpush1.msra.mxu0 0.0
    %405 = vmatprep.mubr.f32.mxu0 0.0
    %406 = vmatmul.mubr.f32.gmra.mrb[0].mxu0 %v53
    %v407 = vpop.f32.mrb[0].mxu0
    %v408 = vadd.f32 0.0, %v407
    %v409 = vpop.f32.mrb[0].mxu0
    %410 = vmatprep.mubr.f32.mxu0 0.0
    %411 = vmatmul.mubr.f32.gmra.mrb[0].mxu0 %v56
    %v412 = vpop.f32.mrb[0].mxu0
    %v413 = vadd.f32 0.0, %v412
    %v414 = vpop.f32.mrb[0].mxu0
    %415 = vmatprep.mubr.f32.mxu0 0.0
    %416 = vmatmul.mubr.f32.gmra.mrb[0].mxu0 %v59
    %v417 = vpop.f32.mrb[0].mxu0
    %v418 = vadd.f32 0.0, %v417
    %v419 = vpop.f32.mrb[0].mxu0
    %420 = vmatprep.mubr.f32.mxu0 0.0
    %421 = vmatmul.mubr.f32.gmra.mrb[0].mxu0 %v62
    %v422 = vpop.f32.mrb[0].mxu0
    %v423 = vadd.f32 0.0, %v422
    %v424 = vpop.f32.mrb[0].mxu0
    %425 = vdwg.mxu0
    %426 = vmatprep.subr.mxu0 0.0
    %427 = vmatpush1.msra.mxu0 %v332
    %428 = vmatprep.subr.mxu0 0.0
    %429 = vmatpush1.msra.mxu0 %v333
    %430 = vmatprep.subr.mxu0 0.0
    %431 = vmatpush1.msra.mxu0 %v334
    %432 = vmatprep.subr.mxu0 0.0
    %433 = vmatpush1.msra.mxu0 %v335
    %434 = vmatprep.subr.mxu0 0.0
    %435 = vmatpush1.msra.mxu0 0.0
    %436 = vmatprep.subr.mxu0 0.0
    %437 = vmatpush1.msra.mxu0 0.0
    %438 = vmatprep.subr.mxu0 0.0
    %439 = vmatpush1.msra.mxu0 0.0
    %440 = vmatprep.subr.mxu0 0.0
    %441 = vmatpush1.msra.mxu0 0.0
    %442 = vmatprep.subr.mxu0 0.0
    %443 = vmatpush1.msra.mxu0 0.0
    %444 = vmatprep.subr.mxu0 0.0
    %445 = vmatpush1.msra.mxu0 0.0
    %446 = vmatprep.subr.mxu0 0.0
    %447 = vmatpush1.msra.mxu0 0.0
    %448 = vmatprep.subr.mxu0 0.0
    %449 = vmatpush1.msra.mxu0 0.0
    %450 = vmatprep.subr.mxu0 0.0
    %451 = vmatpush1.msra.mxu0 0.0
    %452 = vmatprep.subr.mxu0 0.0
    %453 = vmatpush1.msra.mxu0 0.0
    %454 = vmatprep.subr.mxu0 0.0
    %455 = vmatpush1.msra.mxu0 0.0
    %456 = vmatprep.subr.mxu0 0.0
    %457 = vmatpush1.msra.mxu0 0.0
    %458 = vmatprep.subr.mxu0 0.0
    %459 = vmatpush1.msra.mxu0 0.0
    %460 = vmatprep.subr.mxu0 0.0
    %461 = vmatpush1.msra.mxu0 0.0
    %462 = vmatprep.subr.mxu0 0.0
    %463 = vmatpush1.msra.mxu0 0.0
    %464 = vmatprep.subr.mxu0 0.0
    %465 = vmatpush1.msra.mxu0 0.0
    %466 = vmatprep.subr.mxu0 0.0
    %467 = vmatpush1.msra.mxu0 0.0
    %468 = vmatprep.subr.mxu0 0.0
    %469 = vmatpush1.msra.mxu0 0.0
    %470 = vmatprep.subr.mxu0 0.0
    %471 = vmatpush1.msra.mxu0 0.0
    %472 = vmatprep.subr.mxu0 0.0
    %473 = vmatpush1.msra.mxu0 0.0
    %474 = vmatprep.subr.mxu0 0.0
    %475 = vmatpush1.msra.mxu0 0.0
    %476 = vmatprep.subr.mxu0 0.0
    %477 = vmatpush1.msra.mxu0 0.0
    %478 = vmatprep.subr.mxu0 0.0
    %479 = vmatpush1.msra.mxu0 0.0
    %480 = vmatprep.subr.mxu0 0.0
    %481 = vmatpush1.msra.mxu0 0.0
    %482 = vmatprep.subr.mxu0 0.0
    %483 = vmatpush1.msra.mxu0 0.0
    %484 = vmatprep.subr.mxu0 0.0
    %485 = vmatpush1.msra.mxu0 0.0
    %486 = vmatprep.subr.mxu0 0.0
    %487 = vmatpush1.msra.mxu0 0.0
    %488 = vmatprep.subr.mxu0 0.0
    %489 = vmatpush1.msra.mxu0 0.0
    %490 = vmatprep.mubr.f32.mxu0 0.0
    %491 = vmatmul.mubr.f32.gmra.mrb[0].mxu0 %v150
    %v492 = vpop.f32.mrb[0].mxu0
    %v493 = vadd.f32 %v408, %v492
    %v494 = vpop.f32.mrb[0].mxu0
    %495 = vmatprep.mubr.f32.mxu0 0.0
    %496 = vmatmul.mubr.f32.gmra.mrb[0].mxu0 %v153
    %v497 = vpop.f32.mrb[0].mxu0
    %v498 = vadd.f32 %v413, %v497
    %v499 = vpop.f32.mrb[0].mxu0
    %500 = vmatprep.mubr.f32.mxu0 0.0
    %501 = vmatmul.mubr.f32.gmra.mrb[0].mxu0 %v156
    %v502 = vpop.f32.mrb[0].mxu0
    %v503 = vadd.f32 %v418, %v502
    %v504 = vpop.f32.mrb[0].mxu0
    %505 = vmatprep.mubr.f32.mxu0 0.0
    %506 = vmatmul.mubr.f32.gmra.mrb[0].mxu0 %v159
    %v507 = vpop.f32.mrb[0].mxu0
    %v508 = vadd.f32 %v423, %v507
    %v509 = vpop.f32.mrb[0].mxu0
    %510 = vdwg.mxu0
    %s511 = scalar_lea.vmem %s6, 1
    %v512 = vld [vmem:[%s511] sm:$0x1]
    %v514 = vlaneseq
    %v515 = vshrl.u32 %v514, 7
    %v516 = vsub.s32 0, %v515
    %v517 = vrot.slane %v512, %v516
    %v519 = vmul.f32 %v35, %v517
    %v520 = vmul.f32 %v36, %v517
    %v521 = vmul.f32 %v37, %v517
    %v522 = vmul.f32 %v38, %v517
    %v523 = vsel %vm51, %v519, 0.0
    %524 = vadd.xlane.f32.xlu0 %v523
    %v525 = vpop.xlane.xlu0 %524
    %v526 = vsel %vm51, %v520, 0.0
    %527 = vadd.xlane.f32.xlu0 %v526
    %v528 = vpop.xlane.xlu0 %527
    %v529 = vsel %vm51, %v521, 0.0
    %530 = vadd.xlane.f32.xlu0 %v529
    %v531 = vpop.xlane.xlu0 %530
    %v532 = vsel %vm51, %v522, 0.0
    %533 = vadd.xlane.f32.xlu0 %v532
    %v534 = vpop.xlane.xlu0 %533
    %v535 = vadd.f32 %v493, %v525
    %v536 = vadd.f32 %v498, %v528
    %v537 = vadd.f32 %v503, %v531
    %v538 = vadd.f32 %v508, %v534
    %v539 = vtanh.pop %v535
    %v540 = vtanh.pop %v536
    %v541 = vtanh.pop %v537
    %v542 = vtanh.pop %v538
    %v543 = vmul.f32 %v539, %v280
    %v544 = vmul.f32 %v540, %v285
    %v545 = vmul.f32 %v541, %v290
    %v546 = vmul.f32 %v542, %v295
    %v547 = vsel %vm301, %v543, 0.0
    %v548 = vsel %vm301, %v544, 0.0
    %v549 = vadd.f32 %v547, %v548
    %v550 = vsel %vm301, %v545, 0.0
    %v551 = vadd.f32 %v549, %v550
    %v552 = vsel %vm301, %v546, 0.0
    %v553 = vadd.f32 %v551, %v552
    %v554 = vrot.slane %v553, 4
    %v555 = vadd.f32 %v553, %v554
    %v556 = vrot.slane %v555, 2
    %v557 = vadd.f32 %v555, %v556
    %v558 = vrot.slane %v557, 1
    %v559 = vadd.f32 %v557, %v558
    %v560 = vsel %vm301, %v559, -inf
    %561 = vmax.xlane.f32.xlu0 %v560
    %v562 = vpop.xlane.xlu0 %561
    %v563 = vsub.f32 %v559, %v562
    %v564 = vmul.f32 %v563, 1.442695
    %v565 = vpow.pop %v564
    %v566 = vsel %vm301, %v565, 0.0
    %567 = vadd.xlane.f32.xlu0 %v566
    %v568 = vpop.xlane.xlu0 %567
    %v569 = vrcp.pop %v568
    %v570 = vmul.f32 %v568, %v569
    %v571 = vsub.f32 2.0, %v570
    %v572 = vmul.f32 %v569, %v571
    %v573 = vmul.f32 %v565, %v572
    %s574 = scalar_lea.vmem [#allocation2], 1
    %575 = vst.msk [vmem:[%s574] sm:$0x1] %vm329, %v573
    // Predicated region
    $region30: #{tpu_custom_call.1} parent=1 // pred_check
      _
    $region31: #{tpu_custom_call.1} parent=1 // pred_check_branch
      %577 = sbr.rel (0) target = $region33
    $region32: #{tpu_custom_call.1} parent=1 // pred_region
      %s579 = ssub.s32 32, 32
      %580 = vsyncadd [#allocation3], %s579
      %s581 = sshll.u32 [#allocation2], 4
      %s582 = int_to_ptr.vmem [resolvable:$true] %s581
      %587 = dma.vmem_to_hbm [thread:$0]  %s582, 32, %s7, [#allocation3], 16, 16, 1
    $region33: #{tpu_custom_call.1} parent=1 // pred_fallthru
      _
    // Predicated region
    $region34: #{tpu_custom_call.1} parent=1 // pred_check
      _
    $region35: #{tpu_custom_call.1} parent=1 // pred_check_branch
      %589 = sbr.rel (0) target = $region37
    $region36: #{tpu_custom_call.1} parent=1 // pred_region
      %590 = dma.done [#allocation3], 32
    $region37: #{tpu_custom_call.1} parent=1 // pred_fallthru
      _
    %591 = vsyncpa [#allocation3], 1

</llo_original>
